<compile_context>
chip_gen: v6e
topology: v6e:2x2x1
jax: 0.10.0
libtpu: 0.0.40
codegen_flags: <defaults>
</compile_context>

<pallas_src>
from functools import partial

import jax
import jax.numpy as jnp
import numpy as np
from jax.experimental import pallas as pl
from jax.experimental.pallas import tpu as pltpu

CLS_ID = 101
SEP_ID = 102
PAD_ID = 0
MAX_LENGTH = 77
LANE = 128
SUBLANE = 8


def _round_up(x, m):
    return ((x + m - 1) // m) * m


def _bert_pack_kernel(eff_ref, tok_ref, out_ref):
    """Build BERT input_ids: [CLS] + pre-shifted tokens + [SEP] + padding.

    eff_ref : [TB, 1]   int32  clamped sequence lengths (<= max_length-2)
    tok_ref : [TB, 128] int32  raw token j-1 already sits at column j
    out_ref : [TB, 128] int32  packed input_ids (only [:, :max_length] used)
    """
    toks = tok_ref[...]                                        # [TB, 128]
    eff = eff_ref[...]                                         # [TB, 1]
    pos = jax.lax.broadcasted_iota(jnp.int32, toks.shape, 1)   # lane index

    out = jnp.where(
        pos == 0,
        jnp.int32(CLS_ID),
        jnp.where(
            pos <= eff,
            toks,
            jnp.where(pos == eff + 1, jnp.int32(SEP_ID), jnp.int32(PAD_ID)),
        ),
    )
    out_ref[...] = out


def bert_tokenizer_forward(token_ids, lengths, max_length=MAX_LENGTH,
                           tile_b=1024):
    """Numeric equivalent of BERTTokenizer.forward on pre-tokenized ids."""
    B, raw_len = token_ids.shape
    W = _round_up(max_length, LANE)                 # 128: one vreg per row
    n_use = min(raw_len, max_length - 2)            # tokens that can survive

    # batch padded to a sublane multiple; tile rows in multiples of 8
    B_pad = _round_up(B, SUBLANE)
    TB = min(B_pad, _round_up(tile_b, SUBLANE))
    grid = (pl.cdiv(B_pad, TB),)

    # Pre-shift: token j-1 of each row lands at output column j.  Single pad
    # op (no zeros+scatter), keeps the buffer lane-dense at width 128.
    toks_p = jnp.pad(
        token_ids[:, :n_use].astype(jnp.int32),
        ((0, B_pad - B), (1, W - 1 - n_use)),
        constant_values=PAD_ID,
    )
    # Clamp once in the wrapper (also fixes lengths > raw_len).
    eff = jnp.minimum(lengths.astype(jnp.int32), jnp.int32(n_use)).reshape(B, 1)
    eff_p = jnp.pad(eff, ((0, B_pad - B), (0, 0)))

    out = pl.pallas_call(
        _bert_pack_kernel,
        out_shape=jax.ShapeDtypeStruct((B_pad, W), jnp.int32),
        grid=grid,
        in_specs=[
            pl.BlockSpec((TB, 1), lambda i: (i, 0)),
            pl.BlockSpec((TB, W), lambda i: (i, 0)),
        ],
        out_specs=pl.BlockSpec((TB, W), lambda i: (i, 0)),
        compiler_params=pltpu.CompilerParams(
            dimension_semantics=("parallel",)),
    )(eff_p, toks_p)

    return out[:B, :max_length]


def bert_tokenizer_encode(token_ids, lengths, vq_interface=True,
                          max_length=MAX_LENGTH):
    """Mirrors BERTTokenizer.encode()."""
    tokens = bert_tokenizer_forward(token_ids, lengths, max_length)
    if not vq_interface:
        return tokens
    return (None, None, [None, None, tokens])


def _reference_pack(token_ids, lengths, max_length=MAX_LENGTH):
    token_ids = np.asarray(token_ids)
    lengths = np.asarray(lengths)
    B, raw_len = token_ids.shape
    out = np.zeros((B, max_length), np.int32)
    for b in range(B):
        n = min(int(lengths[b]), max_length - 2, raw_len)
        row = [CLS_ID] + list(token_ids[b, :n].astype(np.int32)) + [SEP_ID]
        out[b, : len(row)] = np.asarray(row, np.int32)
    return out


if __name__ == "__main__":
    key = jax.random.PRNGKey(0)
    B, raw_len = 2, 90
    token_ids = jax.random.randint(key, (B, raw_len), 1000, 29000,
                                   dtype=jnp.int32)
    # first sequence is short (gets padding), second is long (gets truncated)
    lengths = jnp.array([5, 90], dtype=jnp.int32)

    tokens = bert_tokenizer_forward(token_ids, lengths)
    tokens = jax.block_until_ready(tokens)

    ref = _reference_pack(token_ids, lengths)
    assert tokens.shape == (B, MAX_LENGTH), tokens.shape
    assert tokens.dtype == jnp.int32
    np.testing.assert_array_equal(np.asarray(tokens), ref)

    # exercise the vq_interface encode() path too
    _, _, (_, _, toks2) = bert_tokenizer_encode(token_ids, lengths)
    jax.block_until_ready(toks2)
    np.testing.assert_array_equal(np.asarray(toks2), ref)

    print("KERNEL_OK")
</pallas_src>

<mosaic_0001>
module attributes {stable_mosaic.version = 11 : i64} {
  func.func @_bert_pack_kernel(%arg0: i32, %arg1: memref<8x1xi32, #tpu.memory_space<vmem>>, %arg2: memref<8x128xi32, #tpu.memory_space<vmem>>, %arg3: memref<8x128xi32, #tpu.memory_space<vmem>>) attributes {dimension_semantics = [#tpu.dimension_semantics<parallel>], iteration_bounds = array<i64: 1>, scalar_prefetch = 0 : i64, scratch_operands = 0 : i64, tpu.core_type = #tpu.core_type<tc>, window_params = [{transform_indices = @transform_0, window_bounds = array<i64: 8, 1>}, {transform_indices = @transform_1, window_bounds = array<i64: 8, 128>}, {transform_indices = @transform_2, window_bounds = array<i64: 8, 128>}]} {
    %c0 = arith.constant 0 : index
    %c0_0 = arith.constant 0 : index
    %0 = vector.load %arg2[%c0, %c0_0] : memref<8x128xi32, #tpu.memory_space<vmem>>, vector<8x128xi32>
    %c0_1 = arith.constant 0 : index
    %c0_2 = arith.constant 0 : index
    %1 = vector.load %arg1[%c0_1, %c0_2] : memref<8x1xi32, #tpu.memory_space<vmem>>, vector<8x1xi32>
    %2 = tpu.iota {dimensions = array<i32: 1>} : vector<8x128xi32>
    %c0_i32 = arith.constant 0 : i32
    %3 = vector.broadcast %c0_i32 : i32 to vector<8x128xi32>
    %4 = arith.cmpi eq, %2, %3 : vector<8x128xi32>
    %5 = vector.broadcast %1 : vector<8x1xi32> to vector<8x128xi32>
    %6 = arith.cmpi sle, %2, %5 : vector<8x128xi32>
    %c1_i32 = arith.constant 1 : i32
    %7 = vector.broadcast %c1_i32 : i32 to vector<8x1xi32>
    %8 = arith.addi %1, %7 : vector<8x1xi32>
    %9 = vector.broadcast %8 : vector<8x1xi32> to vector<8x128xi32>
    %10 = arith.cmpi eq, %2, %9 : vector<8x128xi32>
    %c102_i32 = arith.constant 102 : i32
    %c0_i32_3 = arith.constant 0 : i32
    %11 = vector.broadcast %c102_i32 : i32 to vector<8x128xi32>
    %12 = vector.broadcast %c0_i32_3 : i32 to vector<8x128xi32>
    %13 = arith.select %10, %11, %12 : vector<8x128xi1>, vector<8x128xi32>
    %14 = arith.select %6, %0, %13 : vector<8x128xi1>, vector<8x128xi32>
    %c101_i32 = arith.constant 101 : i32
    %15 = vector.broadcast %c101_i32 : i32 to vector<8x128xi32>
    %16 = arith.select %4, %15, %14 : vector<8x128xi1>, vector<8x128xi32>
    %c0_4 = arith.constant 0 : index
    %c0_5 = arith.constant 0 : index
    %17 = vector.load %arg3[%c0_4, %c0_5] : memref<8x128xi32, #tpu.memory_space<vmem>>, vector<8x128xi32>
    tpu.vector_store %arg3[%c0_4, %c0_5], %16 {strides = array<i32>} : memref<8x128xi32, #tpu.memory_space<vmem>>, vector<8x128xi32>,
    return
  }
  func.func @transform_0(%arg0: i32) -> (i32, i32) {
    %c0_i32 = arith.constant 0 : i32
    %c0_i32_0 = arith.constant 0 : i32
    return %arg0, %c0_i32 : i32, i32
  }
  func.func @transform_1(%arg0: i32) -> (i32, i32) {
    %c0_i32 = arith.constant 0 : i32
    %c0_i32_0 = arith.constant 0 : i32
    return %arg0, %c0_i32 : i32, i32
  }
  func.func @transform_2(%arg0: i32) -> (i32, i32) {
    %c0_i32 = arith.constant 0 : i32
    %c0_i32_0 = arith.constant 0 : i32
    return %arg0, %c0_i32 : i32, i32
  }
}

</mosaic_0001>

<llo_original>
// kernel: tpu_custom_call.1
$region0: #{tpu_custom_call.1}
  #allocation0 [shape = 'u32[]', space=smem, size = 0x4, offset = 0x4, fixed_abs, tag = 'smem constant byte address 0x4 - core index']
  #allocation1 [shape = 'u32[144,128]{1,0:T(1,128)}', space=vmem, size = 0x12000, scoped, tag = 'internal scratch']
  %s0 = inlined_call_operand.vmem [shape: s32[8,1], index: 0, kind: input, shape index: {}]
  %s1 = inlined_call_operand.vmem [shape: s32[8,128], index: 1, kind: input, shape index: {}]
  %s2 = inlined_call_operand.hbm [shape: s32[8,128], index: 2, kind: output, shape index: {}]
  %s3 = sld [smem:[#allocation0]]
  $region18: #{tpu_custom_call.1} parent=0
    _
  %s5 = ssub.s32 1, %s3
  %s6 = scalar_select 0, %s5, %s3
  $region1: #{tpu_custom_call.1} parent=0
    #allocation2 [shape = 'u8[4096]{0}', space=vmem, size = 0x1000, scoped, tag = 'output window, operand 0, single buffered']
    #allocation3 [shape = 's32[1]{0}', space=sflag, size = 0x4, scoped, tag = 'scoped memory for tpu_custom_call.1']
    %7 = vsyncpa [#allocation3], 0
    // Predicated region
    $region2: #{tpu_custom_call.1} parent=1 // pred_check
      _
    $region3: #{tpu_custom_call.1} parent=1 // pred_check_branch
      %9 = sbr.rel (0) target = $region5
    $region4: #{tpu_custom_call.1} parent=1 // pred_region
      _
    $region5: #{tpu_custom_call.1} parent=1 // pred_fallthru
      _
    // Predicated region
    $region6: #{tpu_custom_call.1} parent=1 // pred_check
      _
    $region7: #{tpu_custom_call.1} parent=1 // pred_check_branch
      %11 = sbr.rel (0) target = $region9
    $region8: #{tpu_custom_call.1} parent=1 // pred_region
      _
    $region9: #{tpu_custom_call.1} parent=1 // pred_fallthru
      _
    %v12 = vld [vmem:[%s1] sm:$0xff]
    %v13 = vld [vmem:[%s0] sm:$0xff]
    %v14 = vlaneseq
    %v15 = vand.u32 %v14, 127
    %vm16 = vcmp.eq.s32.totalorder %v15, 0
    %17 = vset.pattern.permute.xlu0 0
    %18 = vperm.xlu0 %17, %v13
    %v19 = vpop.permute.xlu0 %18
    %vm20 = vcmp.le.s32.totalorder %v15, %v19
    %v21 = vadd.s32 %v13, 1
    %22 = vset.pattern.permute.xlu0 0
    %23 = vperm.xlu0 %22, %v21
    %v24 = vpop.permute.xlu0 %23
    %vm25 = vcmp.eq.s32.totalorder %v15, %v24
    %v26 = vsel %vm25, 102, 0
    %v27 = vsel %vm20, %v12, %v26
    %v28 = vsel %vm16, 101, %v27
    %29 = vst [vmem:[#allocation2] sm:$0xff] %v28
    // Predicated region
    $region10: #{tpu_custom_call.1} parent=1 // pred_check
      _
    $region11: #{tpu_custom_call.1} parent=1 // pred_check_branch
      %31 = sbr.rel (0) target = $region13
    $region12: #{tpu_custom_call.1} parent=1 // pred_region
      %s33 = ssub.s32 128, 128
      %34 = vsyncadd [#allocation3], %s33
      %s36 = sshll.u32 [#allocation2], 4
      %s37 = int_to_ptr.vmem [resolvable:$true] %s36
      %39 = dma.vmem_to_hbm [thread:$0]  %s37, 128, %s2, [#allocation3]
    $region13: #{tpu_custom_call.1} parent=1 // pred_fallthru
      _
    // Predicated region
    $region14: #{tpu_custom_call.1} parent=1 // pred_check
      _
    $region15: #{tpu_custom_call.1} parent=1 // pred_check_branch
      %41 = sbr.rel (0) target = $region17
    $region16: #{tpu_custom_call.1} parent=1 // pred_region
      %42 = dma.done [#allocation3], 128
    $region17: #{tpu_custom_call.1} parent=1 // pred_fallthru
      _
    %43 = vsyncpa [#allocation3], 1

</llo_original>
